<compile_context>
chip_gen: v7x
topology: tpu7x:2x2x1
jax: 0.10.0
libtpu: 0.0.40
codegen_flags: <defaults>
</compile_context>

<pallas_src>
import jax
import jax.numpy as jnp
from jax import lax
from jax.experimental import pallas as pl
from jax.experimental.pallas import tpu as pltpu


def net_kernel(x_ref, w_ref, b_ref, o_ref):
    # x: (G, B, IN)   w: (OUT, IN)   b: (1, OUT)   o: (G, B, OUT)
    G, B, IN = x_ref.shape
    OUT = o_ref.shape[-1]

    # One MXU matmul over all G*B rows of this grid step (single vmatmul
    # stream).  rhs stays in its natural (OUT, IN) layout; contract on IN for
    # both operands so no transpose is needed anywhere.
    x2d = x_ref[...].reshape(G * B, IN)
    logits = lax.dot_general(
        x2d, w_ref[...],
        dimension_numbers=(((1,), (1,)), ((), ())),
        preferred_element_type=jnp.float32,
    )                                                # (G*B, OUT) f32
    logits = logits + b_ref[...]                     # bias: VPU broadcast-add
    logits = logits.reshape(G, B, OUT)

    # Softmax over dim=0 of each (B, OUT) instance (== axis=1 of this block),
    # exactly F.softmax(x, dim=0).  B is never tiled, so the reduction is
    # complete within the block.
    m = jnp.max(logits, axis=1, keepdims=True)
    e = jnp.exp(logits - m)
    denom = jnp.sum(e, axis=1, keepdims=True)        # >= 1 by construction
    o_ref[...] = (e * pl.reciprocal(denom, approx=True)).astype(o_ref.dtype)


def net_forward_batched(x_stack, w, b, *, max_instances_per_block=1024):
    """Evaluate N independent forward passes of Net in a single pallas_call.

    x_stack: (N, B, 9)   w: (3, 9)   b: (3,) or (1, 3)
    returns: (N, B, 3) with softmax over the B axis of each instance.
    """
    N, B, IN = x_stack.shape
    OUT = w.shape[0]

    # Pack as many instances as possible into one grid step; for small N this
    # collapses the whole problem into a single step (one dispatch, one DMA
    # in / one DMA out).  VMEM use per block is ~ G*B*(IN+OUT)*4 bytes, tiny.
    G = min(N, max_instances_per_block)
    num_blocks = pl.cdiv(N, G)

    b2 = jnp.asarray(b, jnp.float32).reshape(1, OUT)

    # Split across TensorCores only when there is real per-core work.
    dim_sem = ("parallel",) if num_blocks > 1 else ("arbitrary",)

    return pl.pallas_call(
        net_kernel,
        out_shape=jax.ShapeDtypeStruct((N, B, OUT), jnp.float32),
        grid=(num_blocks,),
        in_specs=[
            pl.BlockSpec((G, B, IN), lambda n: (n, 0, 0)),   # G instances / step
            pl.BlockSpec((OUT, IN), lambda n: (0, 0)),       # invariant weight
            pl.BlockSpec((1, OUT), lambda n: (0, 0)),        # invariant bias
        ],
        out_specs=pl.BlockSpec((G, B, OUT), lambda n: (n, 0, 0)),
        compiler_params=pltpu.CompilerParams(dimension_semantics=dim_sem),
    )(x_stack.astype(jnp.float32), w.astype(jnp.float32), b2)


def net_forward(x, w, b):
    """Single forward pass, identical semantics to Net.forward(x)."""
    return net_forward_batched(x[None], w, b)[0]


if __name__ == "__main__":
    key = jax.random.PRNGKey(0)
    k_x, k_w, k_b = jax.random.split(key, 3)

    N, B, IN, OUT = 4, 8, 9, 3   # N independent problem instances

    # Deterministic init mimicking nn.Linear's uniform(-1/sqrt(in), 1/sqrt(in))
    bound = 1.0 / (IN ** 0.5)
    w = jax.random.uniform(k_w, (OUT, IN), jnp.float32, -bound, bound)
    b = jax.random.uniform(k_b, (OUT,), jnp.float32, -bound, bound)

    x_stack = jax.random.normal(k_x, (N, B, IN), jnp.float32)

    # Batched path: N forwards in a single pallas_call / single grid step.
    out_batched = jax.block_until_ready(net_forward_batched(x_stack, w, b))

    # Single-instance path (same semantics as the PyTorch module).
    out_single = jax.block_until_ready(net_forward(x_stack[0], w, b))

    # Plain-JAX reference: per-instance Linear + softmax over dim=0.
    ref_logits = jnp.einsum("nbi,oi->nbo", x_stack, w) + b[None, None, :]
    ref = jax.nn.softmax(ref_logits, axis=1)          # dim=0 within each instance

    assert out_batched.shape == (N, B, OUT)
    assert out_single.shape == (B, OUT)
    # approx-EUP reciprocal introduces ~1e-4-level error on the probabilities.
    assert jnp.max(jnp.abs(out_batched - ref)) < 1e-3
    assert jnp.max(jnp.abs(out_single - ref[0])) < 1e-3

    print("KERNEL_OK")
</pallas_src>

<mosaic_0001>
module attributes {stable_mosaic.version = 11 : i64} {
  func.func @net_kernel(%arg0: i32, %arg1: memref<4x8x9xf32, #tpu.memory_space<vmem>>, %arg2: memref<3x9xf32, #tpu.memory_space<vmem>>, %arg3: memref<1x3xf32, #tpu.memory_space<vmem>>, %arg4: memref<4x8x3xf32, #tpu.memory_space<vmem>>) attributes {dimension_semantics = [#tpu.dimension_semantics<arbitrary>], iteration_bounds = array<i64: 1>, scalar_prefetch = 0 : i64, scratch_operands = 0 : i64, tpu.core_type = #tpu.core_type<tc>, window_params = [{transform_indices = @transform_0, window_bounds = array<i64: 4, 8, 9>}, {pipeline_mode = #tpu.pipeline_mode<synchronous>, transform_indices = @transform_1, window_bounds = array<i64: 3, 9>}, {pipeline_mode = #tpu.pipeline_mode<synchronous>, transform_indices = @transform_2, window_bounds = array<i64: 1, 3>}, {transform_indices = @transform_3, window_bounds = array<i64: 4, 8, 3>}]} {
    %c0 = arith.constant 0 : index
    %c0_0 = arith.constant 0 : index
    %c0_1 = arith.constant 0 : index
    %0 = vector.load %arg1[%c0, %c0_0, %c0_1] : memref<4x8x9xf32, #tpu.memory_space<vmem>>, vector<4x8x9xf32>
    %1 = vector.shape_cast %0 : vector<4x8x9xf32> to vector<32x9xf32>
    %c0_2 = arith.constant 0 : index
    %c0_3 = arith.constant 0 : index
    %2 = vector.load %arg2[%c0_2, %c0_3] : memref<3x9xf32, #tpu.memory_space<vmem>>, vector<3x9xf32>
    %cst = arith.constant dense<0.000000e+00> : vector<32x3xf32>
    %3 = tpu.matmul %1, %2, %cst {dimension_numbers = #tpu.dot_dimension_numbers<[1], [1], [0], [0], [0, 0, 1, 0], [], []>} : vector<32x9xf32>, vector<3x9xf32>, vector<32x3xf32> -> vector<32x3xf32>
    %c0_4 = arith.constant 0 : index
    %c0_5 = arith.constant 0 : index
    %4 = vector.load %arg3[%c0_4, %c0_5] : memref<1x3xf32, #tpu.memory_space<vmem>>, vector<1x3xf32>
    %5 = vector.broadcast %4 : vector<1x3xf32> to vector<32x3xf32>
    %6 = arith.addf %3, %5 : vector<32x3xf32>
    %7 = vector.shape_cast %6 : vector<32x3xf32> to vector<4x8x3xf32>
    %cst_6 = arith.constant dense<0xFF800000> : vector<4x3xf32>
    %8 = vector.multi_reduction <maximumf>, %7, %cst_6 [1] : vector<4x8x3xf32> to vector<4x3xf32>
    %9 = vector.shape_cast %8 : vector<4x3xf32> to vector<4x1x3xf32>
    %10 = vector.broadcast %9 : vector<4x1x3xf32> to vector<4x8x3xf32>
    %11 = arith.subf %7, %10 : vector<4x8x3xf32>
    %12 = math.exp %11 : vector<4x8x3xf32>
    %cst_7 = arith.constant dense<0.000000e+00> : vector<4x3xf32>
    %13 = vector.multi_reduction <add>, %12, %cst_7 [1] : vector<4x8x3xf32> to vector<4x3xf32>
    %14 = vector.shape_cast %13 : vector<4x3xf32> to vector<4x1x3xf32>
    %15 = tpu.reciprocal %14 {approx = true} : vector<4x1x3xf32> -> vector<4x1x3xf32>
    %16 = vector.broadcast %15 : vector<4x1x3xf32> to vector<4x8x3xf32>
    %17 = arith.mulf %12, %16 : vector<4x8x3xf32>
    %c0_8 = arith.constant 0 : index
    %c0_9 = arith.constant 0 : index
    %c0_10 = arith.constant 0 : index
    %18 = vector.load %arg4[%c0_8, %c0_9, %c0_10] : memref<4x8x3xf32, #tpu.memory_space<vmem>>, vector<4x8x3xf32>
    tpu.vector_store %arg4[%c0_8, %c0_9, %c0_10], %17 {strides = array<i32>} : memref<4x8x3xf32, #tpu.memory_space<vmem>>, vector<4x8x3xf32>,
    return
  }
  func.func @transform_0(%arg0: i32) -> (i32, i32, i32) {
    %c0_i32 = arith.constant 0 : i32
    %c0_i32_0 = arith.constant 0 : i32
    %c0_i32_1 = arith.constant 0 : i32
    return %arg0, %c0_i32, %c0_i32_0 : i32, i32, i32
  }
  func.func @transform_1(%arg0: i32) -> (i32, i32) {
    %c0_i32 = arith.constant 0 : i32
    %c0_i32_0 = arith.constant 0 : i32
    %c0_i32_1 = arith.constant 0 : i32
    return %c0_i32, %c0_i32_0 : i32, i32
  }
  func.func @transform_2(%arg0: i32) -> (i32, i32) {
    %c0_i32 = arith.constant 0 : i32
    %c0_i32_0 = arith.constant 0 : i32
    %c0_i32_1 = arith.constant 0 : i32
    return %c0_i32, %c0_i32_0 : i32, i32
  }
  func.func @transform_3(%arg0: i32) -> (i32, i32, i32) {
    %c0_i32 = arith.constant 0 : i32
    %c0_i32_0 = arith.constant 0 : i32
    %c0_i32_1 = arith.constant 0 : i32
    return %arg0, %c0_i32, %c0_i32_0 : i32, i32, i32
  }
}

</mosaic_0001>

<llo_original>
// kernel: tpu_custom_call.1
$region0: #{tpu_custom_call.1}
  #allocation0 [shape = 'u32[]', space=smem, size = 0x4, offset = 0x4, fixed_abs, tag = 'smem constant byte address 0x4 - core index']
  #allocation1 [shape = 'u32[144,128]{1,0:T(1,128)}', space=vmem, size = 0x12000, scoped, tag = 'internal scratch']
  %s0 = inlined_call_operand.hbm [shape: f32[4,8,9], index: 0, kind: input, shape index: {}]
  %s1 = inlined_call_operand.hbm [shape: f32[3,9], index: 1, kind: input, shape index: {}]
  %s2 = inlined_call_operand.vmem [shape: f32[1,3], index: 2, kind: input, shape index: {}]
  %s3 = inlined_call_operand.vmem [shape: f32[4,8,3], index: 3, kind: output, shape index: {}]
  %s4 = sld [smem:[#allocation0]]
  $region30: #{tpu_custom_call.1} parent=0
    _
  %s6 = ssub.s32 1, %s4
  %s7 = scalar_select 0, %s6, %s4
  $region1: #{tpu_custom_call.1} parent=0
    #allocation2 [shape = 'u8[16384]{0}', space=vmem, size = 0x4000, scoped, tag = 'input window, operand 0, single buffered']
    #allocation3 [shape = 's32[1]{0}', space=sflag, size = 0x4, scoped, tag = 'scoped memory for tpu_custom_call.1']
    #allocation4 [shape = 'u8[2048]{0}', space=vmem, size = 0x800, scoped, tag = 'input window, operand 1, single buffered']
    #allocation5 [shape = 's32[1]{0}', space=sflag, size = 0x4, scoped, tag = 'scoped memory for tpu_custom_call.1']
    %8 = vsyncpa [#allocation3], 0
    %9 = vsyncpa [#allocation5], 0
    // Predicated region
    $region2: #{tpu_custom_call.1} parent=1 // pred_check
      _
    $region3: #{tpu_custom_call.1} parent=1 // pred_check_branch
      %11 = sbr.rel (0) target = $region5
    $region4: #{tpu_custom_call.1} parent=1 // pred_region
      %s13 = ssub.s32 512, 512
      %14 = vsyncadd [#allocation3], %s13
      %s15 = sshll.u32 [#allocation2], 4
      %s16 = int_to_ptr.vmem [resolvable:$true] %s15
      %21 = dma.hbm_to_vmem [thread:$0]  %s0, 512, %s16, [#allocation3], 128, 128, 8
    $region5: #{tpu_custom_call.1} parent=1 // pred_fallthru
      _
    // Predicated region
    $region6: #{tpu_custom_call.1} parent=1 // pred_check
      _
    $region7: #{tpu_custom_call.1} parent=1 // pred_check_branch
      %23 = sbr.rel (0) target = $region9
    $region8: #{tpu_custom_call.1} parent=1 // pred_region
      %s25 = ssub.s32 64, 64
      %26 = vsyncadd [#allocation5], %s25
      %s28 = sshll.u32 [#allocation4], 4
      %s29 = int_to_ptr.vmem [resolvable:$true] %s28
      %31 = dma.hbm_to_vmem [thread:$0]  %s1, 64, %s29, [#allocation5]
    $region9: #{tpu_custom_call.1} parent=1 // pred_fallthru
      _
    // Predicated region
    $region10: #{tpu_custom_call.1} parent=1 // pred_check
      _
    $region11: #{tpu_custom_call.1} parent=1 // pred_check_branch
      %33 = sbr.rel (0) target = $region13
    $region12: #{tpu_custom_call.1} parent=1 // pred_region
      _
    $region13: #{tpu_custom_call.1} parent=1 // pred_fallthru
      _
    // Predicated region
    $region14: #{tpu_custom_call.1} parent=1 // pred_check
      _
    $region15: #{tpu_custom_call.1} parent=1 // pred_check_branch
      %35 = sbr.rel (0) target = $region17
    $region16: #{tpu_custom_call.1} parent=1 // pred_region
      %36 = dma.done [#allocation3], 512
    $region17: #{tpu_custom_call.1} parent=1 // pred_fallthru
      _
    // Predicated region
    $region18: #{tpu_custom_call.1} parent=1 // pred_check
      _
    $region19: #{tpu_custom_call.1} parent=1 // pred_check_branch
      %38 = sbr.rel (0) target = $region21
    $region20: #{tpu_custom_call.1} parent=1 // pred_region
      %39 = dma.done [#allocation5], 64
    $region21: #{tpu_custom_call.1} parent=1 // pred_fallthru
      _
    %v40 = vld [vmem:[#allocation2] sm:$0xff]
    %v41 = vld [vmem:[#allocation2 + $0x8] sm:$0xff]
    %v42 = vld [vmem:[#allocation2 + $0x10] sm:$0xff]
    %v43 = vld [vmem:[#allocation2 + $0x18] sm:$0xff]
    %v44 = vld [vmem:[#allocation4] sm:$0x7]
    %v45 = vld [vmem:[%s2] sm:$0x1]
    %v47 = vlaneseq
    %v48 = vshrl.u32 %v47, 7
    %v49 = vsub.s32 0, %v48
    %v50 = vrot.slane %v45, %v49
    %vm52 = vcmask 72704
    %v54 = vsel %vm52, %v40, 0
    %v57 = vsel %vm52, %v41, 0
    %v60 = vsel %vm52, %v42, 0
    %v63 = vsel %vm52, %v43, 0
    %v66 = vsel %vm52, %v44, 0
    %68 = vmatprep.subr.mxu0 0.0
    %69 = vmatpush1.xpose.msra.mxu0 %v66
    %70 = vmatprep.subr.mxu0 0.0
    %71 = vmatpush1.xpose.msra.mxu0 0.0
    %72 = vmatprep.subr.mxu0 0.0
    %73 = vmatpush1.xpose.msra.mxu0 0.0
    %74 = vmatprep.subr.mxu0 0.0
    %75 = vmatpush1.xpose.msra.mxu0 0.0
    %76 = vmatprep.subr.mxu0 0.0
    %77 = vmatpush1.xpose.msra.mxu0 0.0
    %78 = vmatprep.subr.mxu0 0.0
    %79 = vmatpush1.xpose.msra.mxu0 0.0
    %80 = vmatprep.subr.mxu0 0.0
    %81 = vmatpush1.xpose.msra.mxu0 0.0
    %82 = vmatprep.subr.mxu0 0.0
    %83 = vmatpush1.xpose.msra.mxu0 0.0
    %84 = vmatprep.subr.mxu0 0.0
    %85 = vmatpush1.xpose.msra.mxu0 0.0
    %86 = vmatprep.subr.mxu0 0.0
    %87 = vmatpush1.xpose.msra.mxu0 0.0
    %88 = vmatprep.subr.mxu0 0.0
    %89 = vmatpush1.xpose.msra.mxu0 0.0
    %90 = vmatprep.subr.mxu0 0.0
    %91 = vmatpush1.xpose.msra.mxu0 0.0
    %92 = vmatprep.subr.mxu0 0.0
    %93 = vmatpush1.xpose.msra.mxu0 0.0
    %94 = vmatprep.subr.mxu0 0.0
    %95 = vmatpush1.xpose.msra.mxu0 0.0
    %96 = vmatprep.subr.mxu0 0.0
    %97 = vmatpush1.xpose.msra.mxu0 0.0
    %98 = vmatprep.subr.mxu0 0.0
    %99 = vmatpush1.xpose.msra.mxu0 0.0
    %100 = vmatprep.subr.mxu0 0.0
    %101 = vmatpush1.xpose.msra.mxu0 0.0
    %102 = vmatprep.subr.mxu0 0.0
    %103 = vmatpush1.xpose.msra.mxu0 0.0
    %104 = vmatprep.subr.mxu0 0.0
    %105 = vmatpush1.xpose.msra.mxu0 0.0
    %106 = vmatprep.subr.mxu0 0.0
    %107 = vmatpush1.xpose.msra.mxu0 0.0
    %108 = vmatprep.subr.mxu0 0.0
    %109 = vmatpush1.xpose.msra.mxu0 0.0
    %110 = vmatprep.subr.mxu0 0.0
    %111 = vmatpush1.xpose.msra.mxu0 0.0
    %112 = vmatprep.subr.mxu0 0.0
    %113 = vmatpush1.xpose.msra.mxu0 0.0
    %114 = vmatprep.subr.mxu0 0.0
    %115 = vmatpush1.xpose.msra.mxu0 0.0
    %116 = vmatprep.subr.mxu0 0.0
    %117 = vmatpush1.xpose.msra.mxu0 0.0
    %118 = vmatprep.subr.mxu0 0.0
    %119 = vmatpush1.xpose.msra.mxu0 0.0
    %120 = vmatprep.subr.mxu0 0.0
    %121 = vmatpush1.xpose.msra.mxu0 0.0
    %122 = vmatprep.subr.mxu0 0.0
    %123 = vmatpush1.xpose.msra.mxu0 0.0
    %124 = vmatprep.subr.mxu0 0.0
    %125 = vmatpush1.xpose.msra.mxu0 0.0
    %126 = vmatprep.subr.mxu0 0.0
    %127 = vmatpush1.xpose.msra.mxu0 0.0
    %128 = vmatprep.subr.mxu0 0.0
    %129 = vmatpush1.xpose.msra.mxu0 0.0
    %130 = vmatprep.subr.mxu0 0.0
    %131 = vmatpush1.xpose.msra.mxu0 0.0
    %132 = vmatprep.mubr.f32.mxu0 0.0
    %133 = vmatmul.mubr.f32.gmra.mrb[0].mxu0 %v54
    %v134 = vpop.f32.mrb[0].mxu0
    %v135 = vadd.f32 %v50, %v134
    %v136 = vpop.f32.mrb[0].mxu0
    %137 = vmatprep.mubr.f32.mxu0 0.0
    %138 = vmatmul.mubr.f32.gmra.mrb[0].mxu0 %v57
    %v139 = vpop.f32.mrb[0].mxu0
    %v140 = vadd.f32 %v50, %v139
    %v141 = vpop.f32.mrb[0].mxu0
    %142 = vmatprep.mubr.f32.mxu0 0.0
    %143 = vmatmul.mubr.f32.gmra.mrb[0].mxu0 %v60
    %v144 = vpop.f32.mrb[0].mxu0
    %v145 = vadd.f32 %v50, %v144
    %v146 = vpop.f32.mrb[0].mxu0
    %147 = vmatprep.mubr.f32.mxu0 0.0
    %148 = vmatmul.mubr.f32.gmra.mrb[0].mxu0 %v63
    %v149 = vpop.f32.mrb[0].mxu0
    %v150 = vadd.f32 %v50, %v149
    %v151 = vpop.f32.mrb[0].mxu0
    %152 = vdwg.mxu0
    %vm153 = vcmask 23552
    %v154 = vsel %vm153, %v135, -inf
    %v155 = vrot.slane %v154, 4
    %v156 = vmax.f32 %v154, %v155
    %v157 = vrot.slane %v156, 2
    %v158 = vmax.f32 %v156, %v157
    %v159 = vrot.slane %v158, 1
    %v160 = vmax.f32 %v158, %v159
    %v161 = vsel %vm153, %v140, -inf
    %v162 = vrot.slane %v161, 4
    %v163 = vmax.f32 %v161, %v162
    %v164 = vrot.slane %v163, 2
    %v165 = vmax.f32 %v163, %v164
    %v166 = vrot.slane %v165, 1
    %v167 = vmax.f32 %v165, %v166
    %v168 = vsel %vm153, %v145, -inf
    %v169 = vrot.slane %v168, 4
    %v170 = vmax.f32 %v168, %v169
    %v171 = vrot.slane %v170, 2
    %v172 = vmax.f32 %v170, %v171
    %v173 = vrot.slane %v172, 1
    %v174 = vmax.f32 %v172, %v173
    %v175 = vsel %vm153, %v150, -inf
    %v176 = vrot.slane %v175, 4
    %v177 = vmax.f32 %v175, %v176
    %v178 = vrot.slane %v177, 2
    %v179 = vmax.f32 %v177, %v178
    %v180 = vrot.slane %v179, 1
    %v181 = vmax.f32 %v179, %v180
    %v182 = vsub.f32 %v135, %v160
    %v183 = vsub.f32 %v140, %v167
    %v184 = vsub.f32 %v145, %v174
    %v185 = vsub.f32 %v150, %v181
    %v186 = vmul.f32 %v182, 1.442695
    %v187 = vpow.pop %v186
    %v188 = vmul.f32 %v183, 1.442695
    %v189 = vpow.pop %v188
    %v190 = vmul.f32 %v184, 1.442695
    %v191 = vpow.pop %v190
    %v192 = vmul.f32 %v185, 1.442695
    %v193 = vpow.pop %v192
    %v194 = vsel %vm153, %v187, 0.0
    %v195 = vrot.slane %v194, 4
    %v196 = vadd.f32 %v194, %v195
    %v197 = vrot.slane %v196, 2
    %v198 = vadd.f32 %v196, %v197
    %v199 = vrot.slane %v198, 1
    %v200 = vadd.f32 %v198, %v199
    %v201 = vsel %vm153, %v189, 0.0
    %v202 = vrot.slane %v201, 4
    %v203 = vadd.f32 %v201, %v202
    %v204 = vrot.slane %v203, 2
    %v205 = vadd.f32 %v203, %v204
    %v206 = vrot.slane %v205, 1
    %v207 = vadd.f32 %v205, %v206
    %v208 = vsel %vm153, %v191, 0.0
    %v209 = vrot.slane %v208, 4
    %v210 = vadd.f32 %v208, %v209
    %v211 = vrot.slane %v210, 2
    %v212 = vadd.f32 %v210, %v211
    %v213 = vrot.slane %v212, 1
    %v214 = vadd.f32 %v212, %v213
    %v215 = vsel %vm153, %v193, 0.0
    %v216 = vrot.slane %v215, 4
    %v217 = vadd.f32 %v215, %v216
    %v218 = vrot.slane %v217, 2
    %v219 = vadd.f32 %v217, %v218
    %v220 = vrot.slane %v219, 1
    %v221 = vadd.f32 %v219, %v220
    %v222 = vrcp.pop %v200
    %v223 = vrcp.pop %v207
    %v224 = vrcp.pop %v214
    %v225 = vrcp.pop %v221
    %v226 = vmul.f32 %v187, %v222
    %v227 = vmul.f32 %v189, %v223
    %v228 = vmul.f32 %v191, %v224
    %v229 = vmul.f32 %v193, %v225
    %230 = vst.msk [vmem:[%s3] sm:$0xff] %vm153, %v226
    %231 = vst.msk [vmem:[%s3 + $0x8] sm:$0xff] %vm153, %v227
    %232 = vst.msk [vmem:[%s3 + $0x10] sm:$0xff] %vm153, %v228
    %233 = vst.msk [vmem:[%s3 + $0x18] sm:$0xff] %vm153, %v229
    // Predicated region
    $region22: #{tpu_custom_call.1} parent=1 // pred_check
      _
    $region23: #{tpu_custom_call.1} parent=1 // pred_check_branch
      %235 = sbr.rel (0) target = $region25
    $region24: #{tpu_custom_call.1} parent=1 // pred_region
      _
    $region25: #{tpu_custom_call.1} parent=1 // pred_fallthru
      _
    // Predicated region
    $region26: #{tpu_custom_call.1} parent=1 // pred_check
      _
    $region27: #{tpu_custom_call.1} parent=1 // pred_check_branch
      %237 = sbr.rel (0) target = $region29
    $region28: #{tpu_custom_call.1} parent=1 // pred_region
      _
    $region29: #{tpu_custom_call.1} parent=1 // pred_fallthru
      _
    %238 = vsyncpa [#allocation3], 1
    %239 = vsyncpa [#allocation5], 1

</llo_original>
